<compile_context>
chip_gen: v7x
topology: tpu7x:2x2x1
jax: 0.10.0
libtpu: 0.0.40
codegen_flags: <defaults>
</compile_context>

<pallas_src>
import functools

import jax
import jax.numpy as jnp
from jax import lax
from jax.experimental import pallas as pl
from jax.experimental.pallas import tpu as pltpu


_BRANCHES = ((3, 1, 1), (5, 2, 4), (7, 3, 9))   # (kernel, dilation, padding)


# --------------------------------------------------------------------------
# pltpu.roll direction probe (guards against any cross-version semantics
# difference; picked once, cached, and baked statically into the kernel).
# --------------------------------------------------------------------------
@functools.lru_cache(maxsize=None)
def _roll_mode():
    """How to express result[i] = x[i + delta] with a lane roll."""
    def probe(x_ref, o_ref):
        o_ref[...] = pltpu.roll(x_ref[...], shift=1, axis=1)

    x = jnp.arange(8 * 128, dtype=jnp.float32).reshape(8, 128)
    out = pl.pallas_call(
        probe, out_shape=jax.ShapeDtypeStruct((8, 128), jnp.float32))(x)
    if bool(jnp.array_equal(out, jnp.roll(x, 1, axis=1))):
        return "neg"    # pltpu.roll(x, s)[i] == x[i - s]  -> shift = -delta
    if bool(jnp.array_equal(out, jnp.roll(x, -1, axis=1))):
        return "pos"    # pltpu.roll(x, s)[i] == x[i + s]  -> shift = +delta
    return "jnp"        # fallback: jnp.roll (correct, slower lowering)


def _shift_lanes(x, delta, L, mode):
    """result[..., i] = x[..., (i + delta) % L] (static delta, lane axis)."""
    if delta == 0:
        return x
    if mode == "neg":
        return pltpu.roll(x, shift=(-delta) % L, axis=1)
    if mode == "pos":
        return pltpu.roll(x, shift=delta % L, axis=1)
    return jnp.roll(x, -delta, axis=1)   # TODO(synk): slow fallback path


def _tap_mask(ph, pw, dh, dw, H, W):
    """Constant (1, L) bool mask: True where the tap source (h+dh, w+dw) is
    inside the image.  None if the tap is always valid."""
    conds = []
    if dh < 0:
        conds.append(ph >= -dh)
    elif dh > 0:
        conds.append(ph < H - dh)
    if dw < 0:
        conds.append(pw >= -dw)
    elif dw > 0:
        conds.append(pw < W - dw)
    if not conds:
        return None
    m = conds[0]
    for c in conds[1:]:
        m = jnp.logical_and(m, c)
    return m


# ----------------------------- kernel ----------------------------------------

def _msa_kernel(x_ref, w1_ref, gb1_ref, w2_ref, gb2_ref, o_ref, z_ref, *,
                H, W, NB, Cout, Cmid, eps, roll_mode):
    HW = H * W
    L = NB * HW
    nbr = len(_BRANCHES)

    # Constant per-lane coordinate maps (folded from iota at compile time).
    pos = lax.broadcasted_iota(jnp.int32, (1, L), 1)
    pw = pos % W
    ph = (pos // W) % H
    img = pos // HW                              # image index per lane (NB > 1)

    def in_relu(y, gb_ref):
        # InstanceNorm2d(affine=True) + ReLU on (C, L); per-(channel, image)
        # stats over the lane axis.  Centered two-pass variance; f32 epilogue.
        gamma = gb_ref[:, 0:1]
        beta = gb_ref[:, 1:2]
        if NB == 1:
            mean = jnp.mean(y, axis=1, keepdims=True)
            cent = y - mean
            var = jnp.mean(cent * cent, axis=1, keepdims=True)
            scale = gamma * lax.rsqrt(var + eps)
            shift = beta - mean * scale
            return jnp.maximum(y * scale + shift, 0.0)
        # Batch folded onto lanes: per-image stats via constant lane masks.
        inv_hw = 1.0 / float(HW)
        scale_map = shift_map = None
        for n in range(NB):
            m = img == n                                              # (1, L)
            mf = m.astype(jnp.float32)
            mean = jnp.sum(y * mf, axis=1, keepdims=True) * inv_hw    # (C, 1)
            cent = (y - mean) * mf
            var = jnp.sum(cent * cent, axis=1, keepdims=True) * inv_hw
            sc = gamma * lax.rsqrt(var + eps)
            sh = beta - mean * sc
            if scale_map is None:
                scale_map = jnp.broadcast_to(sc, y.shape)
                shift_map = jnp.broadcast_to(sh, y.shape)
            else:
                scale_map = jnp.where(m, sc, scale_map)
                shift_map = jnp.where(m, sh, shift_map)
        return jnp.maximum(y * scale_map + shift_map, 0.0)

    # ---- stage 1: all four 1x1 convs in one contraction + one epilogue ------
    x = x_ref[0]                                                  # (Cin, L)
    y1 = jnp.dot(w1_ref[...], x, preferred_element_type=jnp.float32)
    y1 = in_relu(y1, gb1_ref)                                     # (Cout+3*Cmid, L)
    b1 = y1[0:Cout, :]                                            # branch1x1
    mid = y1[Cout:Cout + nbr * Cmid, :]                           # (3*Cmid, L)

    # ---- stage 2: one block-diagonal contraction over all 83 taps -----------
    # z_ref[g*Cout:(g+1)*Cout, :] = W_{branch, tap g} @ mid_{branch}
    z_ref[...] = jnp.dot(w2_ref[...], mid, preferred_element_type=jnp.float32)

    # Each dilated conv output = sum over its taps of the lane-rolled Z_tap,
    # masked at image borders.  Rolls go to the XLU slot; no relayouts.
    accs = []
    g = 0
    for (K, d, p) in _BRANCHES:
        acc = None
        for kh in range(K):
            dh = kh * d - p
            for kw in range(K):
                dw = kw * d - p
                zt = z_ref[g * Cout:(g + 1) * Cout, :]            # (Cout, L)
                zt = _shift_lanes(zt, dh * W + dw, L, roll_mode)
                mask = _tap_mask(ph, pw, dh, dw, H, W)
                if mask is not None:
                    zt = jnp.where(mask, zt, 0.0)
                acc = zt if acc is None else acc + zt
                g += 1
        accs.append(acc)

    # One fused InstanceNorm+affine+ReLU epilogue for all three branches.
    y2 = in_relu(jnp.concatenate(accs, axis=0), gb2_ref)          # (3*Cout, L)
    fused = y2[0:Cout, :] + y2[Cout:2 * Cout, :] + y2[2 * Cout:3 * Cout, :]

    # Lane-dense, sublane-aligned output writes (channel concat = 2 slices).
    o_ref[0, 0:Cout, :] = fused.astype(o_ref.dtype)
    o_ref[0, Cout:2 * Cout, :] = b1.astype(o_ref.dtype)


# ----------------------------- wrapper ----------------------------------------

def _pack_params(params):
    (w1, g1, be1) = params["branch1x1"]
    (w3a, g3a, b3a), (w3b, g3b, b3b) = params["branch3x3"]
    (w5a, g5a, b5a), (w5b, g5b, b5b) = params["branch5x5"]
    (w7a, g7a, b7a), (w7b, g7b, b7b) = params["branch7x7"]

    def as_mat(w):                                   # (Co, Ci, 1, 1) -> (Co, Ci)
        return w.reshape(w.shape[0], w.shape[1]).astype(jnp.float32)

    # Stage 1 rows = [branch1x1 (Cout), mid3 (Cmid), mid5 (Cmid), mid7 (Cmid)].
    w_s1 = jnp.concatenate([as_mat(w1), as_mat(w3a), as_mat(w5a), as_mat(w7a)], axis=0)
    gb_s1 = jnp.stack([jnp.concatenate([g1, g3a, g5a, g7a]),
                       jnp.concatenate([be1, b3a, b5a, b7a])],
                      axis=1).astype(jnp.float32)

    # Stage 2: tap-stacked, block-diagonal over the 3 mid-channel groups.
    # Global tap g -> rows [g*Cout, (g+1)*Cout); branch b -> cols [b*Cmid, (b+1)*Cmid).
    def taps(w, bi, nbr):
        Co, Ci, K, _ = w.shape
        wt = jnp.transpose(w, (2, 3, 0, 1)).reshape(K * K * Co, Ci)
        return jnp.pad(wt, ((0, 0), (bi * Ci, (nbr - 1 - bi) * Ci))).astype(jnp.float32)

    w_s2 = jnp.concatenate([taps(w3b, 0, 3), taps(w5b, 1, 3), taps(w7b, 2, 3)], axis=0)
    gb_s2 = jnp.stack([jnp.concatenate([g3b, g5b, g7b]),
                       jnp.concatenate([b3b, b5b, b7b])],
                      axis=1).astype(jnp.float32)
    return w_s1, gb_s1, w_s2, gb_s2


def msa_block_pallas(x, params, *, eps=1e-5, fold_batch=True):
    """MSA_block forward.  x: (N, Cin, H, W) f32 -> (N, 2*Cout, H, W).

    fold_batch=True : batch folded onto lanes, grid=(1,)  (v5e / v6e).
    fold_batch=False: grid=(N,) marked "parallel"         (v7x, 2 TCs).
    """
    N, Cin, H, W = x.shape
    Cout = params["branch1x1"][0].shape[0]
    Cmid = params["branch3x3"][0][0].shape[0]
    HW = H * W
    n_taps = sum(k * k for (k, _, _) in _BRANCHES)

    w_s1, gb_s1, w_s2, gb_s2 = _pack_params(params)

    NB = N if fold_batch else 1
    L = NB * HW
    steps = N // NB

    if fold_batch:
        # (N, Cin, H, W) -> (1, Cin, N*H*W); lane index = n*HW + h*W + w.
        x_k = jnp.transpose(x, (1, 0, 2, 3)).reshape(1, Cin, L)
    else:
        x_k = x.reshape(N, Cin, HW)

    kern = functools.partial(
        _msa_kernel, H=H, W=W, NB=NB, Cout=Cout, Cmid=Cmid, eps=eps,
        roll_mode=_roll_mode())

    x_spec = pl.BlockSpec((1, Cin, L), lambda n: (n, 0, 0))
    o_spec = pl.BlockSpec((1, 2 * Cout, L), lambda n: (n, 0, 0))
    # Parameter blocks are grid-invariant (block index 0 every step) so Pallas
    # only copies them in once.  TODO(synk): pipeline_mode=pl.Buffered(1) would
    # also drop their second buffer; not load-bearing at these sizes.
    p_specs = [pl.BlockSpec(p.shape, lambda n: (0, 0))
               for p in (w_s1, gb_s1, w_s2, gb_s2)]

    out = pl.pallas_call(
        kern,
        out_shape=jax.ShapeDtypeStruct((steps, 2 * Cout, L), x.dtype),
        grid_spec=pltpu.PrefetchScalarGridSpec(
            num_scalar_prefetch=0,
            grid=(steps,),
            in_specs=[x_spec] + p_specs,
            out_specs=o_spec,
            scratch_shapes=[pltpu.VMEM((n_taps * Cout, L), jnp.float32)],
        ),
        compiler_params=pltpu.CompilerParams(
            dimension_semantics=("parallel",),
            vmem_limit_bytes=32 * 1024 * 1024,
        ),
    )(x_k, w_s1, gb_s1, w_s2, gb_s2)

    if fold_batch:
        return jnp.transpose(out.reshape(2 * Cout, N, H, W), (1, 0, 2, 3))
    return out.reshape(N, 2 * Cout, H, W)


# ----------------------------- reference --------------------------------------

def _basic_conv_ref(x, w, gamma, beta, *, padding=0, dilation=1, eps=1e-5):
    y = lax.conv_general_dilated(
        x, w, window_strides=(1, 1),
        padding=((padding, padding), (padding, padding)),
        rhs_dilation=(dilation, dilation),
        dimension_numbers=("NCHW", "OIHW", "NCHW"))
    mean = jnp.mean(y, axis=(2, 3), keepdims=True)
    var = jnp.mean((y - mean) ** 2, axis=(2, 3), keepdims=True)
    y = (y - mean) * lax.rsqrt(var + eps)
    y = y * gamma[None, :, None, None] + beta[None, :, None, None]
    return jnp.maximum(y, 0.0)


def msa_block_ref(x, params, *, eps=1e-5):
    (w1, g1, be1) = params["branch1x1"]
    (w3a, g3a, b3a), (w3b, g3b, b3b) = params["branch3x3"]
    (w5a, g5a, b5a), (w5b, g5b, b5b) = params["branch5x5"]
    (w7a, g7a, b7a), (w7b, g7b, b7b) = params["branch7x7"]
    b1 = _basic_conv_ref(x, w1, g1, be1, eps=eps)
    b3 = _basic_conv_ref(_basic_conv_ref(x, w3a, g3a, b3a, eps=eps),
                         w3b, g3b, b3b, padding=1, dilation=1, eps=eps)
    b5 = _basic_conv_ref(_basic_conv_ref(x, w5a, g5a, b5a, eps=eps),
                         w5b, g5b, b5b, padding=4, dilation=2, eps=eps)
    b7 = _basic_conv_ref(_basic_conv_ref(x, w7a, g7a, b7a, eps=eps),
                         w7b, g7b, b7b, padding=9, dilation=3, eps=eps)
    return jnp.concatenate([b3 + b5 + b7, b1], axis=1)


# ------------------------------- main ------------------------------------------

if __name__ == "__main__":
    key = jax.random.PRNGKey(0)
    N, Cin, Cout, H, W = 2, 4, 8, 16, 16        # MSA_block(4, 8), 16x16 images
    Cmid = Cin // 2

    def conv_params(k, co, ci, ksz):
        kw_, kg_, kb_ = jax.random.split(k, 3)
        w = jax.random.normal(kw_, (co, ci, ksz, ksz), jnp.float32) * 0.3
        g = 1.0 + 0.1 * jax.random.normal(kg_, (co,), jnp.float32)
        b = 0.1 * jax.random.normal(kb_, (co,), jnp.float32)
        return w, g, b

    kx, k1, k3a, k3b, k5a, k5b, k7a, k7b = jax.random.split(key, 8)
    x = jax.random.normal(kx, (N, Cin, H, W), jnp.float32)
    params = {
        "branch1x1": conv_params(k1, Cout, Cin, 1),
        "branch3x3": (conv_params(k3a, Cmid, Cin, 1), conv_params(k3b, Cout, Cmid, 3)),
        "branch5x5": (conv_params(k5a, Cmid, Cin, 1), conv_params(k5b, Cout, Cmid, 5)),
        "branch7x7": (conv_params(k7a, Cmid, Cin, 1), conv_params(k7b, Cout, Cmid, 7)),
    }

    ref = msa_block_ref(x, params)

    # Batch folded onto lanes (single-TensorCore v5e/v6e fast path).
    out_fold = jax.block_until_ready(msa_block_pallas(x, params, fold_batch=True))
    assert out_fold.shape == (N, 2 * Cout, H, W)
    err_fold = float(jnp.max(jnp.abs(out_fold - ref)))
    assert jnp.allclose(out_fold, ref, atol=5e-4, rtol=5e-4), err_fold

    # One image per grid step ("parallel" grid; v7x two-TensorCore path).
    out_grid = jax.block_until_ready(msa_block_pallas(x, params, fold_batch=False))
    err_grid = float(jnp.max(jnp.abs(out_grid - ref)))
    assert jnp.allclose(out_grid, ref, atol=5e-4, rtol=5e-4), err_grid

    print("KERNEL_OK")
</pallas_src>

<mosaic_0001>
module attributes {stable_mosaic.version = 11 : i64} {
  func.func @probe(%arg0: memref<8x128xf32, #tpu.memory_space<vmem>>, %arg1: memref<8x128xf32, #tpu.memory_space<vmem>>) attributes {dimension_semantics = [], scalar_prefetch = 0 : i64, scratch_operands = 0 : i64, tpu.core_type = #tpu.core_type<tc>} {
    %c0 = arith.constant 0 : index
    %c0_0 = arith.constant 0 : index
    %0 = vector.load %arg0[%c0, %c0_0] : memref<8x128xf32, #tpu.memory_space<vmem>>, vector<8x128xf32>
    %c1_i32 = arith.constant 1 : i32
    %1 = tpu.dynamic_rotate %0 by %c1_i32 dim 1 : vector<8x128xf32>, i32 -> vector<8x128xf32>
    %c0_1 = arith.constant 0 : index
    %c0_2 = arith.constant 0 : index
    %2 = vector.load %arg1[%c0_1, %c0_2] : memref<8x128xf32, #tpu.memory_space<vmem>>, vector<8x128xf32>
    tpu.vector_store %arg1[%c0_1, %c0_2], %1 {strides = array<i32>} : memref<8x128xf32, #tpu.memory_space<vmem>>, vector<8x128xf32>,
    return
  }
}

</mosaic_0001>

<llo_original>
// kernel: tpu_custom_call.1
$region0: #{tpu_custom_call.1}
  #allocation0 [shape = 'u32[]', space=smem, size = 0x4, offset = 0x4, fixed_abs, tag = 'smem constant byte address 0x4 - core index']
  #allocation1 [shape = 'u32[144,128]{1,0:T(1,128)}', space=vmem, size = 0x12000, scoped, tag = 'internal scratch']
  %s0 = inlined_call_operand.hbm [shape: f32[8,128], index: 0, kind: input, shape index: {}]
  %s1 = inlined_call_operand.hbm [shape: f32[8,128], index: 1, kind: output, shape index: {}]
  %s2 = sld [smem:[#allocation0]]
  $region18: #{tpu_custom_call.1} parent=0
    _
  %s4 = ssub.s32 1, %s2
  %s5 = scalar_select 0, %s4, %s2
  $region1: #{tpu_custom_call.1} parent=0
    #allocation2 [shape = 'u8[4096]{0}', space=vmem, size = 0x1000, scoped, tag = 'input window, operand 0, single buffered']
    #allocation3 [shape = 's32[1]{0}', space=sflag, size = 0x4, scoped, tag = 'scoped memory for tpu_custom_call.1']
    #allocation4 [shape = 's32[1]{0}', space=sflag, size = 0x4, scoped, tag = 'scoped memory for tpu_custom_call.1']
    #allocation5 [shape = 'u8[4096]{0}', space=vmem, size = 0x1000, scoped, tag = 'output window, operand 0, single buffered']
    %6 = vsyncpa [#allocation3], 0
    %7 = vsyncpa [#allocation4], 0
    // Predicated region
    $region2: #{tpu_custom_call.1} parent=1 // pred_check
      _
    $region3: #{tpu_custom_call.1} parent=1 // pred_check_branch
      %9 = sbr.rel (0) target = $region5
    $region4: #{tpu_custom_call.1} parent=1 // pred_region
      %s11 = ssub.s32 128, 128
      %12 = vsyncadd [#allocation3], %s11
      %s14 = sshll.u32 [#allocation2], 4
      %s15 = int_to_ptr.vmem [resolvable:$true] %s14
      %17 = dma.hbm_to_vmem [thread:$0]  %s0, 128, %s15, [#allocation3]
    $region5: #{tpu_custom_call.1} parent=1 // pred_fallthru
      _
    // Predicated region
    $region6: #{tpu_custom_call.1} parent=1 // pred_check
      _
    $region7: #{tpu_custom_call.1} parent=1 // pred_check_branch
      %19 = sbr.rel (0) target = $region9
    $region8: #{tpu_custom_call.1} parent=1 // pred_region
      %20 = dma.done [#allocation3], 128
    $region9: #{tpu_custom_call.1} parent=1 // pred_fallthru
      _
    %v21 = vld [vmem:[#allocation2] sm:$0xff]
    %22 = vrot.lane.b32.xlu0 %v21, 1
    %v23 = vpop.permute.xlu0 %22
    %24 = vst [vmem:[#allocation5] sm:$0xff] %v23
    // Predicated region
    $region10: #{tpu_custom_call.1} parent=1 // pred_check
      _
    $region11: #{tpu_custom_call.1} parent=1 // pred_check_branch
      %26 = sbr.rel (0) target = $region13
    $region12: #{tpu_custom_call.1} parent=1 // pred_region
      %s28 = ssub.s32 128, 128
      %29 = vsyncadd [#allocation4], %s28
      %s31 = sshll.u32 [#allocation5], 4
      %s32 = int_to_ptr.vmem [resolvable:$true] %s31
      %34 = dma.vmem_to_hbm [thread:$0]  %s32, 128, %s1, [#allocation4]
    $region13: #{tpu_custom_call.1} parent=1 // pred_fallthru
      _
    // Predicated region
    $region14: #{tpu_custom_call.1} parent=1 // pred_check
      _
    $region15: #{tpu_custom_call.1} parent=1 // pred_check_branch
      %36 = sbr.rel (0) target = $region17
    $region16: #{tpu_custom_call.1} parent=1 // pred_region
      %37 = dma.done [#allocation4], 128
    $region17: #{tpu_custom_call.1} parent=1 // pred_fallthru
      _
    %38 = vsyncpa [#allocation3], 1
    %39 = vsyncpa [#allocation4], 1

</llo_original>
